<compile_context>
chip_gen: v6e
topology: v6e:2x2x1
jax: 0.10.0
libtpu: 0.0.40
codegen_flags: <defaults>
</compile_context>

<pallas_src>
import jax
import jax.numpy as jnp
from jax import lax
from jax.experimental import pallas as pl
from jax.experimental.pallas import tpu as pltpu


def _policy_mlp_kernel(x_ref, w1_ref, b1_ref, w2_ref, b2_ref,
                       w3_ref, b3_ref, w4t_ref, b4_ref, o_ref):
    f32 = jnp.float32
    bf16 = jnp.bfloat16

    # x arrives as f32 (no wrapper-side cast); cast to the bf16 MXU operand
    # here -- the kernel is MXU-bound so this VPU cast hides under MXU slack.
    x = x_ref[...].astype(bf16)                                        # (tb, in_dim)

    # embedding: Linear -> Dropout(p=0, identity) -> ReLU -> Linear
    h1 = jnp.dot(x, w1_ref[...], preferred_element_type=f32) + b1_ref[...]
    h1 = jnp.maximum(h1, 0.0)
    emb = jnp.dot(h1.astype(bf16), w2_ref[...],
                  preferred_element_type=f32) + b2_ref[...]            # (tb, hidden) f32

    # fc head: Linear -> Dropout(p=0, identity) -> ReLU -> Linear(->1) -> Sigmoid
    h2 = jnp.dot(emb.astype(bf16), w3_ref[...],
                 preferred_element_type=f32) + b3_ref[...]             # (tb, h_half) f32
    h2 = jnp.maximum(h2, 0.0)

    # Final Linear has out_features = 1: contract the feature axis of both
    # operands so the batch dimension lands on LANES -> (1, tb) lane-dense
    # result (unmasked vst), no standalone transpose and no N=1 matmul.
    logit = lax.dot_general(
        w4t_ref[...], h2.astype(bf16),
        dimension_numbers=(((1,), (1,)), ((), ())),
        preferred_element_type=f32)                                    # (1, tb)
    logit = logit + b4_ref[0, 0]                                       # scalar bias from SMEM

    # sigmoid; approx reciprocal goes to the EUP slot (free next to MXU work).
    # NOTE: approx=True adds ~1e-3-scale relative error vs exact sigmoid.
    o_ref[...] = pl.reciprocal(1.0 + jnp.exp(-logit), approx=True).astype(o_ref.dtype)


def _round_up(n, m):
    return ((n + m - 1) // m) * m


def _choose_batch_tile(B, tb):
    if tb is not None:
        return min(tb, B)
    if B <= 256:
        # Tiny batch: one whole-batch tile (block dim == full array dim is legal,
        # even when unaligned); splitting across cores doesn't pay here.
        return B
    # Aim for >= 2 grid tiles so both v7x TensorCores get work via the
    # ("parallel",) batch axis, keep tiles MXU-aligned (multiple of 256) and
    # capped at 2048 rows (~16 MB of f32/bf16 intermediates at hidden=512,
    # comfortably inside v7x's 64 MiB VMEM and v5e/v6e's 128 MiB).
    return min(2048, _round_up((B + 1) // 2, 256))


def prepare_params(params):
    """One-time parameter prep (call ONCE, not per forward): bf16 weight casts,
    W4 transpose to (1, h_half), scalar bias reshaped for SMEM."""
    w1, b1, w2, b2, w3, b3, w4, b4 = params
    bf16, f32 = jnp.bfloat16, jnp.float32
    return (w1.astype(bf16), b1.astype(f32),
            w2.astype(bf16), b2.astype(f32),
            w3.astype(bf16), b3.astype(f32),
            w4.T.astype(bf16), b4.reshape(1, 1).astype(f32))


def policy_network_forward(x, prepared_params, *, tb=None):
    """x: (B, in_dim) float32. prepared_params: output of prepare_params().
    Returns (B,) float32 (sigmoid output, squeezed).

    NOTE: the tile (and hence the compiled kernel) depends on B; callers with
    varying candidate-set sizes should bucket B to avoid recompiles."""
    B, in_dim = x.shape
    w1b, b1, w2b, b2, w3b, b3, w4t, b4s = prepared_params
    h_half = w1b.shape[1]
    hidden = w2b.shape[1]

    tb = _choose_batch_tile(B, tb)
    num_tiles = pl.cdiv(B, tb)
    padded_B = num_tiles * tb
    if padded_B != B:
        # zero-pad so padded rows are well-defined; they are sliced off below
        # (anyone consuming the full padded buffer must not read past B).
        x = jnp.pad(x, ((0, padded_B - B), (0, 0)))

    # VMEM budget: f32 intermediates (h1/emb/h2) plus their bf16 MXU copies are
    # ~6 B per element per row; double it for headroom (double-buffered x/out
    # tiles, resident weights, compiler temps) and clamp to [32 MiB, 64 MiB] so
    # we never request more than a v7x core's physical VMEM.
    inter_bytes = tb * (2 * h_half + hidden + in_dim) * 6
    vmem_limit = int(min(64 * 1024 * 1024, max(32 * 1024 * 1024, 2 * inter_bytes)))

    def _const_spec(shape):
        # Resident weights/biases: full-array block + constant index map ->
        # Pallas fetches once and reuses the buffer across grid steps (no
        # re-DMA between consecutive steps).  Single-buffering these via
        # pipeline_mode=pl.Buffered(1) would reclaim <0.5 MB of dead VMEM but
        # is skipped here for lowering robustness across jax versions.
        return pl.BlockSpec(shape, lambda i: (0, 0))

    out = pl.pallas_call(
        _policy_mlp_kernel,
        out_shape=jax.ShapeDtypeStruct((1, padded_B), jnp.float32),
        grid_spec=pltpu.PrefetchScalarGridSpec(
            num_scalar_prefetch=0,
            grid=(num_tiles,),
            in_specs=[
                pl.BlockSpec((tb, in_dim), lambda i: (i, 0)),            # x tile (f32)
                _const_spec((in_dim, h_half)),                            # W1 (bf16)
                _const_spec((1, h_half)),                                 # b1 (f32)
                _const_spec((h_half, hidden)),                            # W2 (bf16)
                _const_spec((1, hidden)),                                 # b2 (f32)
                _const_spec((hidden, h_half)),                            # W3 (bf16)
                _const_spec((1, h_half)),                                 # b3 (f32)
                _const_spec((1, h_half)),                                 # W4^T (bf16)
                pl.BlockSpec(memory_space=pltpu.MemorySpace.SMEM),        # b4 scalar
            ],
            out_specs=pl.BlockSpec((1, tb), lambda i: (0, i)),            # lane-dense
        ),
        compiler_params=pltpu.CompilerParams(
            dimension_semantics=("parallel",),
            vmem_limit_bytes=vmem_limit,
        ),
    )(x, w1b, b1, w2b, b2, w3b, b3, w4t, b4s)

    return out[0, :B]                      # == .squeeze(-1)


def init_params(key, in_dim, hidden_dim):
    """Deterministic init matching nn.Linear shapes; stored as (in, out) + (1, out), f32."""
    h_half = hidden_dim // 2
    keys = jax.random.split(key, 8)

    def linear(kw, kb, fan_in, fan_out):
        bound = 1.0 / jnp.sqrt(fan_in)
        # PyTorch Linear weight is (out, in); we keep the transposed (in, out) form.
        w = jax.random.uniform(kw, (fan_in, fan_out), jnp.float32, -bound, bound)
        b = jax.random.uniform(kb, (1, fan_out), jnp.float32, -bound, bound)
        return w, b

    w1, b1 = linear(keys[0], keys[1], in_dim, h_half)
    w2, b2 = linear(keys[2], keys[3], h_half, hidden_dim)
    w3, b3 = linear(keys[4], keys[5], hidden_dim, h_half)
    w4, b4 = linear(keys[6], keys[7], h_half, 1)
    return (w1, b1, w2, b2, w3, b3, w4, b4)


def reference_forward(x, params):
    """Pure-JAX reference mirroring the kernel's bf16-operand / f32-accumulate matmuls."""
    w1, b1, w2, b2, w3, b3, w4, b4 = params
    bf16, f32 = jnp.bfloat16, jnp.float32
    h = jnp.maximum(
        jnp.dot(x.astype(bf16), w1.astype(bf16), preferred_element_type=f32) + b1, 0.0)
    e = jnp.dot(h.astype(bf16), w2.astype(bf16), preferred_element_type=f32) + b2
    h2 = jnp.maximum(
        jnp.dot(e.astype(bf16), w3.astype(bf16), preferred_element_type=f32) + b3, 0.0)
    logit = jnp.dot(h2.astype(bf16), w4.astype(bf16), preferred_element_type=f32) + b4
    return jax.nn.sigmoid(logit)[:, 0]


if __name__ == "__main__":
    # TODO(synk): Dropout(p=0) is the identity at inference; training-mode dropout
    # would need pltpu.prng_seed/prng_random_bits and is not implemented here.
    key = jax.random.PRNGKey(0)
    k_x, k_p, k_x2 = jax.random.split(key, 3)

    IN_DIM, HIDDEN = 16, 32                 # small test shapes; module default hidden is 512
    params = init_params(k_p, IN_DIM, HIDDEN)
    prepared = prepare_params(params)       # one-time weight prep, hoisted out of forward

    # 1) small batch -> single whole-batch tile
    B1 = 8
    x1 = jax.random.normal(k_x, (B1, IN_DIM), dtype=jnp.float32)
    out1 = jax.block_until_ready(policy_network_forward(x1, prepared))
    ref1 = reference_forward(x1, params)
    assert out1.shape == (B1,), out1.shape
    assert jnp.allclose(out1, ref1, atol=5e-3, rtol=5e-3), (out1, ref1)

    # 2) larger batch -> exercises the 2-tile grid + batch padding path
    #    (both v7x TensorCores busy via dimension_semantics=("parallel",))
    B2 = 600
    x2 = jax.random.normal(k_x2, (B2, IN_DIM), dtype=jnp.float32)
    out2 = jax.block_until_ready(policy_network_forward(x2, prepared))
    ref2 = reference_forward(x2, params)
    assert out2.shape == (B2,), out2.shape
    assert jnp.allclose(out2, ref2, atol=5e-3, rtol=5e-3), (out2, ref2)

    print("KERNEL_OK")
</pallas_src>

<mosaic_0001>
module attributes {stable_mosaic.version = 11 : i64} {
  func.func @_policy_mlp_kernel(%arg0: i32, %arg1: memref<8x16xf32, #tpu.memory_space<vmem>>, %arg2: memref<16x16xbf16, #tpu.memory_space<vmem>>, %arg3: memref<1x16xf32, #tpu.memory_space<vmem>>, %arg4: memref<16x32xbf16, #tpu.memory_space<vmem>>, %arg5: memref<1x32xf32, #tpu.memory_space<vmem>>, %arg6: memref<32x16xbf16, #tpu.memory_space<vmem>>, %arg7: memref<1x16xf32, #tpu.memory_space<vmem>>, %arg8: memref<1x16xbf16, #tpu.memory_space<vmem>>, %arg9: memref<1x1xf32, #tpu.memory_space<smem>>, %arg10: memref<1x8xf32, #tpu.memory_space<vmem>>) attributes {dimension_semantics = [#tpu.dimension_semantics<parallel>], iteration_bounds = array<i64: 1>, scalar_prefetch = 0 : i64, scratch_operands = 0 : i64, tpu.core_type = #tpu.core_type<tc>, window_params = [{transform_indices = @transform_0, window_bounds = array<i64: 8, 16>}, {pipeline_mode = #tpu.pipeline_mode<synchronous>, transform_indices = @transform_1, window_bounds = array<i64: 16, 16>}, {pipeline_mode = #tpu.pipeline_mode<synchronous>, transform_indices = @transform_2, window_bounds = array<i64: 1, 16>}, {pipeline_mode = #tpu.pipeline_mode<synchronous>, transform_indices = @transform_3, window_bounds = array<i64: 16, 32>}, {pipeline_mode = #tpu.pipeline_mode<synchronous>, transform_indices = @transform_4, window_bounds = array<i64: 1, 32>}, {pipeline_mode = #tpu.pipeline_mode<synchronous>, transform_indices = @transform_5, window_bounds = array<i64: 32, 16>}, {pipeline_mode = #tpu.pipeline_mode<synchronous>, transform_indices = @transform_6, window_bounds = array<i64: 1, 16>}, {pipeline_mode = #tpu.pipeline_mode<synchronous>, transform_indices = @transform_7, window_bounds = array<i64: 1, 16>}, {transform_indices = @transform_8, window_bounds = array<i64: 1, 1>}, {transform_indices = @transform_9, window_bounds = array<i64: 1, 8>}]} {
    %c0 = arith.constant 0 : index
    %c0_0 = arith.constant 0 : index
    %0 = vector.load %arg1[%c0, %c0_0] : memref<8x16xf32, #tpu.memory_space<vmem>>, vector<8x16xf32>
    %1 = arith.truncf %0 : vector<8x16xf32> to vector<8x16xbf16>
    %c0_1 = arith.constant 0 : index
    %c0_2 = arith.constant 0 : index
    %2 = vector.load %arg2[%c0_1, %c0_2] : memref<16x16xbf16, #tpu.memory_space<vmem>>, vector<16x16xbf16>
    %cst = arith.constant dense<0.000000e+00> : vector<8x16xf32>
    %3 = tpu.matmul %1, %2, %cst {dimension_numbers = #tpu.dot_dimension_numbers<[1], [0], [0], [1], [0, 0, 1, 1], [], []>} : vector<8x16xbf16>, vector<16x16xbf16>, vector<8x16xf32> -> vector<8x16xf32>
    %c0_3 = arith.constant 0 : index
    %c0_4 = arith.constant 0 : index
    %4 = vector.load %arg3[%c0_3, %c0_4] : memref<1x16xf32, #tpu.memory_space<vmem>>, vector<1x16xf32>
    %5 = vector.broadcast %4 : vector<1x16xf32> to vector<8x16xf32>
    %6 = arith.addf %3, %5 : vector<8x16xf32>
    %cst_5 = arith.constant 0.000000e+00 : f32
    %7 = vector.broadcast %cst_5 : f32 to vector<8x16xf32>
    %8 = arith.maximumf %6, %7 : vector<8x16xf32>
    %9 = arith.truncf %8 : vector<8x16xf32> to vector<8x16xbf16>
    %c0_6 = arith.constant 0 : index
    %c0_7 = arith.constant 0 : index
    %10 = vector.load %arg4[%c0_6, %c0_7] : memref<16x32xbf16, #tpu.memory_space<vmem>>, vector<16x32xbf16>
    %cst_8 = arith.constant dense<0.000000e+00> : vector<8x32xf32>
    %11 = tpu.matmul %9, %10, %cst_8 {dimension_numbers = #tpu.dot_dimension_numbers<[1], [0], [0], [1], [0, 0, 1, 1], [], []>} : vector<8x16xbf16>, vector<16x32xbf16>, vector<8x32xf32> -> vector<8x32xf32>
    %c0_9 = arith.constant 0 : index
    %c0_10 = arith.constant 0 : index
    %12 = vector.load %arg5[%c0_9, %c0_10] : memref<1x32xf32, #tpu.memory_space<vmem>>, vector<1x32xf32>
    %13 = vector.broadcast %12 : vector<1x32xf32> to vector<8x32xf32>
    %14 = arith.addf %11, %13 : vector<8x32xf32>
    %15 = arith.truncf %14 : vector<8x32xf32> to vector<8x32xbf16>
    %c0_11 = arith.constant 0 : index
    %c0_12 = arith.constant 0 : index
    %16 = vector.load %arg6[%c0_11, %c0_12] : memref<32x16xbf16, #tpu.memory_space<vmem>>, vector<32x16xbf16>
    %cst_13 = arith.constant dense<0.000000e+00> : vector<8x16xf32>
    %17 = tpu.matmul %15, %16, %cst_13 {dimension_numbers = #tpu.dot_dimension_numbers<[1], [0], [0], [1], [0, 0, 1, 1], [], []>} : vector<8x32xbf16>, vector<32x16xbf16>, vector<8x16xf32> -> vector<8x16xf32>
    %c0_14 = arith.constant 0 : index
    %c0_15 = arith.constant 0 : index
    %18 = vector.load %arg7[%c0_14, %c0_15] : memref<1x16xf32, #tpu.memory_space<vmem>>, vector<1x16xf32>
    %19 = vector.broadcast %18 : vector<1x16xf32> to vector<8x16xf32>
    %20 = arith.addf %17, %19 : vector<8x16xf32>
    %cst_16 = arith.constant 0.000000e+00 : f32
    %21 = vector.broadcast %cst_16 : f32 to vector<8x16xf32>
    %22 = arith.maximumf %20, %21 : vector<8x16xf32>
    %c0_17 = arith.constant 0 : index
    %c0_18 = arith.constant 0 : index
    %23 = vector.load %arg8[%c0_17, %c0_18] : memref<1x16xbf16, #tpu.memory_space<vmem>>, vector<1x16xbf16>
    %24 = arith.truncf %22 : vector<8x16xf32> to vector<8x16xbf16>
    %cst_19 = arith.constant dense<0.000000e+00> : vector<1x8xf32>
    %25 = tpu.matmul %23, %24, %cst_19 {dimension_numbers = #tpu.dot_dimension_numbers<[1], [1], [0], [0], [0, 0, 1, 0], [], []>} : vector<1x16xbf16>, vector<8x16xbf16>, vector<1x8xf32> -> vector<1x8xf32>
    %c0_20 = arith.constant 0 : index
    %c0_21 = arith.constant 0 : index
    %26 = memref.load %arg9[%c0_20, %c0_21] : memref<1x1xf32, #tpu.memory_space<smem>>
    %27 = vector.broadcast %26 : f32 to vector<1x8xf32>
    %28 = arith.addf %25, %27 : vector<1x8xf32>
    %cst_22 = arith.constant 0.000000e+00 : f32
    %29 = vector.broadcast %cst_22 : f32 to vector<1x8xf32>
    %30 = arith.subf %29, %28 : vector<1x8xf32>
    %31 = math.exp %30 : vector<1x8xf32>
    %cst_23 = arith.constant 1.000000e+00 : f32
    %32 = vector.broadcast %cst_23 : f32 to vector<1x8xf32>
    %33 = arith.addf %32, %31 : vector<1x8xf32>
    %34 = tpu.reciprocal %33 {approx = true} : vector<1x8xf32> -> vector<1x8xf32>
    %c0_24 = arith.constant 0 : index
    %c0_25 = arith.constant 0 : index
    %35 = vector.load %arg10[%c0_24, %c0_25] : memref<1x8xf32, #tpu.memory_space<vmem>>, vector<1x8xf32>
    tpu.vector_store %arg10[%c0_24, %c0_25], %34 {strides = array<i32>} : memref<1x8xf32, #tpu.memory_space<vmem>>, vector<1x8xf32>,
    return
  }
  func.func @transform_0(%arg0: i32) -> (i32, i32) {
    %c0_i32 = arith.constant 0 : i32
    %c0_i32_0 = arith.constant 0 : i32
    return %arg0, %c0_i32 : i32, i32
  }
  func.func @transform_1(%arg0: i32) -> (i32, i32) {
    %c0_i32 = arith.constant 0 : i32
    %c0_i32_0 = arith.constant 0 : i32
    %c0_i32_1 = arith.constant 0 : i32
    return %c0_i32, %c0_i32_0 : i32, i32
  }
  func.func @transform_2(%arg0: i32) -> (i32, i32) {
    %c0_i32 = arith.constant 0 : i32
    %c0_i32_0 = arith.constant 0 : i32
    %c0_i32_1 = arith.constant 0 : i32
    return %c0_i32, %c0_i32_0 : i32, i32
  }
  func.func @transform_3(%arg0: i32) -> (i32, i32) {
    %c0_i32 = arith.constant 0 : i32
    %c0_i32_0 = arith.constant 0 : i32
    %c0_i32_1 = arith.constant 0 : i32
    return %c0_i32, %c0_i32_0 : i32, i32
  }
  func.func @transform_4(%arg0: i32) -> (i32, i32) {
    %c0_i32 = arith.constant 0 : i32
    %c0_i32_0 = arith.constant 0 : i32
    %c0_i32_1 = arith.constant 0 : i32
    return %c0_i32, %c0_i32_0 : i32, i32
  }
  func.func @transform_5(%arg0: i32) -> (i32, i32) {
    %c0_i32 = arith.constant 0 : i32
    %c0_i32_0 = arith.constant 0 : i32
    %c0_i32_1 = arith.constant 0 : i32
    return %c0_i32, %c0_i32_0 : i32, i32
  }
  func.func @transform_6(%arg0: i32) -> (i32, i32) {
    %c0_i32 = arith.constant 0 : i32
    %c0_i32_0 = arith.constant 0 : i32
    %c0_i32_1 = arith.constant 0 : i32
    return %c0_i32, %c0_i32_0 : i32, i32
  }
  func.func @transform_7(%arg0: i32) -> (i32, i32) {
    %c0_i32 = arith.constant 0 : i32
    %c0_i32_0 = arith.constant 0 : i32
    %c0_i32_1 = arith.constant 0 : i32
    return %c0_i32, %c0_i32_0 : i32, i32
  }
  func.func @transform_8(%arg0: i32) -> (i32, i32) {
    %c0_i32 = arith.constant 0 : i32
    %c0_i32_0 = arith.constant 0 : i32
    %c0_i32_1 = arith.constant 0 : i32
    return %c0_i32, %c0_i32_0 : i32, i32
  }
  func.func @transform_9(%arg0: i32) -> (i32, i32) {
    %c0_i32 = arith.constant 0 : i32
    %c0_i32_0 = arith.constant 0 : i32
    return %c0_i32, %arg0 : i32, i32
  }
}

</mosaic_0001>

<llo_original>
// kernel: tpu_custom_call.1
$region0: #{tpu_custom_call.1}
  #allocation0 [shape = 'u32[]', space=smem, size = 0x4, offset = 0x4, fixed_abs, tag = 'smem constant byte address 0x4 - core index']
  #allocation1 [shape = 'u32[144,128]{1,0:T(1,128)}', space=vmem, size = 0x12000, scoped, tag = 'internal scratch']
  #allocation2 [shape = 'f32[1,1]{1,0:T(1,128)S(6)}', space=smem, size = 0x200, scoped, tag = 'scoped memory for tpu_custom_call.1']
  %s0 = inlined_call_operand.vmem [shape: f32[8,16], index: 0, kind: input, shape index: {}]
  %s1 = inlined_call_operand.vmem [shape: bf16[16,16], index: 1, kind: input, shape index: {}]
  %s2 = inlined_call_operand.vmem [shape: f32[1,16], index: 2, kind: input, shape index: {}]
  %s3 = inlined_call_operand.vmem [shape: bf16[16,32], index: 3, kind: input, shape index: {}]
  %s4 = inlined_call_operand.vmem [shape: f32[1,32], index: 4, kind: input, shape index: {}]
  %s5 = inlined_call_operand.vmem [shape: bf16[32,16], index: 5, kind: input, shape index: {}]
  %s6 = inlined_call_operand.vmem [shape: f32[1,16], index: 6, kind: input, shape index: {}]
  %s7 = inlined_call_operand.vmem [shape: bf16[1,16], index: 7, kind: input, shape index: {}]
  %s8 = inlined_call_operand.<no memory space> [shape: f32[1,1], index: 8, kind: input, shape index: {}]
  %s9 = inlined_call_operand.hbm [shape: f32[1,8], index: 9, kind: output, shape index: {}]
  %s10 = sld [smem:[#allocation0]]
  $region46: #{tpu_custom_call.1} parent=0
    _
  %s12 = ssub.s32 1, %s10
  %s13 = scalar_select 0, %s12, %s10
  %14 = sst [smem:[#allocation2]] %s8
  $region1: #{tpu_custom_call.1} parent=0
    #allocation3 [shape = 'u8[512]{0}', space=vmem, size = 0x400, scoped, tag = 'output window, operand 0, single buffered']
    #allocation4 [shape = 's32[1]{0}', space=sflag, size = 0x4, scoped, tag = 'scoped memory for tpu_custom_call.1']
    %15 = vsyncpa [#allocation4], 0
    // Predicated region
    $region2: #{tpu_custom_call.1} parent=1 // pred_check
      _
    $region3: #{tpu_custom_call.1} parent=1 // pred_check_branch
      %17 = sbr.rel (0) target = $region5
    $region4: #{tpu_custom_call.1} parent=1 // pred_region
      _
    $region5: #{tpu_custom_call.1} parent=1 // pred_fallthru
      _
    // Predicated region
    $region6: #{tpu_custom_call.1} parent=1 // pred_check
      _
    $region7: #{tpu_custom_call.1} parent=1 // pred_check_branch
      %19 = sbr.rel (0) target = $region9
    $region8: #{tpu_custom_call.1} parent=1 // pred_region
      _
    $region9: #{tpu_custom_call.1} parent=1 // pred_fallthru
      _
    // Predicated region
    $region10: #{tpu_custom_call.1} parent=1 // pred_check
      _
    $region11: #{tpu_custom_call.1} parent=1 // pred_check_branch
      %21 = sbr.rel (0) target = $region13
    $region12: #{tpu_custom_call.1} parent=1 // pred_region
      _
    $region13: #{tpu_custom_call.1} parent=1 // pred_fallthru
      _
    // Predicated region
    $region14: #{tpu_custom_call.1} parent=1 // pred_check
      _
    $region15: #{tpu_custom_call.1} parent=1 // pred_check_branch
      %23 = sbr.rel (0) target = $region17
    $region16: #{tpu_custom_call.1} parent=1 // pred_region
      _
    $region17: #{tpu_custom_call.1} parent=1 // pred_fallthru
      _
    // Predicated region
    $region18: #{tpu_custom_call.1} parent=1 // pred_check
      _
    $region19: #{tpu_custom_call.1} parent=1 // pred_check_branch
      %25 = sbr.rel (0) target = $region21
    $region20: #{tpu_custom_call.1} parent=1 // pred_region
      _
    $region21: #{tpu_custom_call.1} parent=1 // pred_fallthru
      _
    // Predicated region
    $region22: #{tpu_custom_call.1} parent=1 // pred_check
      _
    $region23: #{tpu_custom_call.1} parent=1 // pred_check_branch
      %27 = sbr.rel (0) target = $region25
    $region24: #{tpu_custom_call.1} parent=1 // pred_region
      _
    $region25: #{tpu_custom_call.1} parent=1 // pred_fallthru
      _
    // Predicated region
    $region26: #{tpu_custom_call.1} parent=1 // pred_check
      _
    $region27: #{tpu_custom_call.1} parent=1 // pred_check_branch
      %29 = sbr.rel (0) target = $region29
    $region28: #{tpu_custom_call.1} parent=1 // pred_region
      _
    $region29: #{tpu_custom_call.1} parent=1 // pred_fallthru
      _
    // Predicated region
    $region30: #{tpu_custom_call.1} parent=1 // pred_check
      _
    $region31: #{tpu_custom_call.1} parent=1 // pred_check_branch
      %31 = sbr.rel (0) target = $region33
    $region32: #{tpu_custom_call.1} parent=1 // pred_region
      _
    $region33: #{tpu_custom_call.1} parent=1 // pred_fallthru
      _
    // Predicated region
    $region34: #{tpu_custom_call.1} parent=1 // pred_check
      _
    $region35: #{tpu_custom_call.1} parent=1 // pred_check_branch
      %33 = sbr.rel (0) target = $region37
    $region36: #{tpu_custom_call.1} parent=1 // pred_region
      _
    $region37: #{tpu_custom_call.1} parent=1 // pred_fallthru
      _
    %v35 = vld [vmem:[%s0] sm:$0xff]
    %v36 = vpack.c.bf16 %v35, %v35
    %v37 = vld [vmem:[%s1] sm:$0xf]
    %v38 = vld [vmem:[%s1 + $0x4] sm:$0xf]
    %v39 = vld [vmem:[%s2] sm:$0x1]
    %v41 = vlaneseq
    %v42 = vshrl.u32 %v41, 7
    %v43 = vsub.s32 0, %v42
    %v44 = vrot.slane %v39, %v43
    %v48 = vunpack.c.l.b16 %v37
    %v49 = vunpack.c.l.b16 %v38
    %v50 = vpack.c.b16 %v49, %v48
    %vm52 = vcmask 130048
    %v54 = vsel %vm52, %v36, 0
    %56 = vmatprep.subr.bf16.mxu0 0
    %57 = vmatpush1.bf16.msra.mxu0 0
    %58 = vmatprep.subr.bf16.mxu0 0
    %59 = vmatpush1.bf16.msra.mxu0 0
    %60 = vmatprep.subr.bf16.mxu0 0
    %61 = vmatpush1.bf16.msra.mxu0 0
    %62 = vmatprep.subr.bf16.mxu0 0
    %63 = vmatpush1.bf16.msra.mxu0 0
    %64 = vmatprep.subr.bf16.mxu0 0
    %65 = vmatpush1.bf16.msra.mxu0 0
    %66 = vmatprep.subr.bf16.mxu0 0
    %67 = vmatpush1.bf16.msra.mxu0 0
    %68 = vmatprep.subr.bf16.mxu0 0
    %69 = vmatpush1.bf16.msra.mxu0 0
    %70 = vmatprep.subr.bf16.mxu0 0
    %71 = vmatpush1.bf16.msra.mxu0 %v50
    %72 = vmatprep.subr.bf16.mxu0 0
    %73 = vmatpush2.bf16.msra.mxu0 0
    %74 = vmatprep.subr.bf16.mxu0 0
    %75 = vmatpush2.bf16.msra.mxu0 0
    %76 = vmatprep.subr.bf16.mxu0 0
    %77 = vmatpush2.bf16.msra.mxu0 0
    %78 = vmatprep.subr.bf16.mxu0 0
    %79 = vmatpush2.bf16.msra.mxu0 0
    %80 = vmatprep.subr.bf16.mxu0 0
    %81 = vmatpush2.bf16.msra.mxu0 0
    %82 = vmatprep.subr.bf16.mxu0 0
    %83 = vmatpush2.bf16.msra.mxu0 0
    %84 = vmatprep.subr.bf16.mxu0 0
    %85 = vmatpush2.bf16.msra.mxu0 0
    %86 = vmatprep.subr.bf16.mxu0 0
    %87 = vmatpush2.bf16.msra.mxu0 0
    %88 = vmatprep.mubr.bf16.mxu0 0
    %89 = vmatmul.mubr.bf16.gmra.mxu0 %v54
    %v90 = vpop.f32.mrf.mxu0
    %v91 = vadd.f32 %v44, %v90
    %v92 = vpop.f32.mrf.mxu0
    %v93 = vpop.f32.mrf.mxu0
    %v94 = vpop.f32.mrf.mxu0
    %95 = vdwg.mxu0
    %v96 = vmax.f32 %v91, 0.0
    %v97 = vpack.c.bf16 %v96, %v96
    %v98 = vld [vmem:[%s3] sm:$0xf]
    %v99 = vld [vmem:[%s3 + $0x4] sm:$0xf]
    %v100 = vld [vmem:[%s4] sm:$0x1]
    %v102 = vlaneseq
    %v103 = vshrl.u32 %v102, 7
    %v104 = vsub.s32 0, %v103
    %v105 = vrot.slane %v100, %v104
    %v109 = vunpack.c.l.b16 %v98
    %v110 = vunpack.c.l.b16 %v99
    %v111 = vpack.c.b16 %v110, %v109
    %v114 = vsel %vm52, %v97, 0
    %116 = vmatprep.subr.bf16.mxu0 0
    %117 = vmatpush1.bf16.msra.mxu0 0
    %118 = vmatprep.subr.bf16.mxu0 0
    %119 = vmatpush1.bf16.msra.mxu0 0
    %120 = vmatprep.subr.bf16.mxu0 0
    %121 = vmatpush1.bf16.msra.mxu0 0
    %122 = vmatprep.subr.bf16.mxu0 0
    %123 = vmatpush1.bf16.msra.mxu0 0
    %124 = vmatprep.subr.bf16.mxu0 0
    %125 = vmatpush1.bf16.msra.mxu0 0
    %126 = vmatprep.subr.bf16.mxu0 0
    %127 = vmatpush1.bf16.msra.mxu0 0
    %128 = vmatprep.subr.bf16.mxu0 0
    %129 = vmatpush1.bf16.msra.mxu0 0
    %130 = vmatprep.subr.bf16.mxu0 0
    %131 = vmatpush1.bf16.msra.mxu0 %v111
    %132 = vmatprep.subr.bf16.mxu0 0
    %133 = vmatpush2.bf16.msra.mxu0 0
    %134 = vmatprep.subr.bf16.mxu0 0
    %135 = vmatpush2.bf16.msra.mxu0 0
    %136 = vmatprep.subr.bf16.mxu0 0
    %137 = vmatpush2.bf16.msra.mxu0 0
    %138 = vmatprep.subr.bf16.mxu0 0
    %139 = vmatpush2.bf16.msra.mxu0 0
    %140 = vmatprep.subr.bf16.mxu0 0
    %141 = vmatpush2.bf16.msra.mxu0 0
    %142 = vmatprep.subr.bf16.mxu0 0
    %143 = vmatpush2.bf16.msra.mxu0 0
    %144 = vmatprep.subr.bf16.mxu0 0
    %145 = vmatpush2.bf16.msra.mxu0 0
    %146 = vmatprep.subr.bf16.mxu0 0
    %147 = vmatpush2.bf16.msra.mxu0 0
    %148 = vmatprep.mubr.bf16.mxu0 0
    %149 = vmatmul.mubr.bf16.gmra.mxu0 %v114
    %v150 = vpop.f32.mrf.mxu0
    %v151 = vadd.f32 %v105, %v150
    %v152 = vpop.f32.mrf.mxu0
    %v153 = vpop.f32.mrf.mxu0
    %v154 = vpop.f32.mrf.mxu0
    %155 = vdwg.mxu0
    %v156 = vpack.c.bf16 %v151, %v151
    %v157 = vld [vmem:[%s5] sm:$0xf]
    %v158 = vld [vmem:[%s5 + $0x4] sm:$0xf]
    %v159 = vld [vmem:[%s5 + $0x8] sm:$0xf]
    %v160 = vld [vmem:[%s5 + $0xc] sm:$0xf]
    %v161 = vld [vmem:[%s6] sm:$0x1]
    %v163 = vlaneseq
    %v164 = vshrl.u32 %v163, 7
    %v165 = vsub.s32 0, %v164
    %v166 = vrot.slane %v161, %v165
    %v172 = vunpack.c.l.b16 %v157
    %v173 = vunpack.c.l.b16 %v158
    %v174 = vunpack.c.l.b16 %v159
    %v175 = vunpack.c.l.b16 %v160
    %v176 = vpack.c.b16 %v173, %v172
    %v177 = vpack.c.b16 %v175, %v174
    %vm180 = vcmask 261120
    %v182 = vsel %vm180, %v156, 0
    %184 = vmatprep.subr.bf16.mxu0 0
    %185 = vmatpush1.bf16.msra.mxu0 0
    %186 = vmatprep.subr.bf16.mxu0 0
    %187 = vmatpush1.bf16.msra.mxu0 0
    %188 = vmatprep.subr.bf16.mxu0 0
    %189 = vmatpush1.bf16.msra.mxu0 0
    %190 = vmatprep.subr.bf16.mxu0 0
    %191 = vmatpush1.bf16.msra.mxu0 0
    %192 = vmatprep.subr.bf16.mxu0 0
    %193 = vmatpush1.bf16.msra.mxu0 0
    %194 = vmatprep.subr.bf16.mxu0 0
    %195 = vmatpush1.bf16.msra.mxu0 0
    %196 = vmatprep.subr.bf16.mxu0 0
    %197 = vmatpush1.bf16.msra.mxu0 %v177
    %198 = vmatprep.subr.bf16.mxu0 0
    %199 = vmatpush1.bf16.msra.mxu0 %v176
    %200 = vmatprep.subr.bf16.mxu0 0
    %201 = vmatpush2.bf16.msra.mxu0 0
    %202 = vmatprep.subr.bf16.mxu0 0
    %203 = vmatpush2.bf16.msra.mxu0 0
    %204 = vmatprep.subr.bf16.mxu0 0
    %205 = vmatpush2.bf16.msra.mxu0 0
    %206 = vmatprep.subr.bf16.mxu0 0
    %207 = vmatpush2.bf16.msra.mxu0 0
    %208 = vmatprep.subr.bf16.mxu0 0
    %209 = vmatpush2.bf16.msra.mxu0 0
    %210 = vmatprep.subr.bf16.mxu0 0
    %211 = vmatpush2.bf16.msra.mxu0 0
    %212 = vmatprep.subr.bf16.mxu0 0
    %213 = vmatpush2.bf16.msra.mxu0 0
    %214 = vmatprep.subr.bf16.mxu0 0
    %215 = vmatpush2.bf16.msra.mxu0 0
    %216 = vmatprep.mubr.bf16.mxu0 0
    %217 = vmatmul.mubr.bf16.gmra.mxu0 %v182
    %v218 = vpop.f32.mrf.mxu0
    %v219 = vadd.f32 %v166, %v218
    %v220 = vpop.f32.mrf.mxu0
    %v221 = vpop.f32.mrf.mxu0
    %v222 = vpop.f32.mrf.mxu0
    %223 = vdwg.mxu0
    %v224 = vmax.f32 %v219, 0.0
    %v225 = vld [vmem:[%s7] sm:$0x1]
    %v226 = vpack.c.bf16 %v224, %v224
    %s227 = sld [smem:[#allocation2]]
    %v228 = vstv %s227
    %v230 = vsel %vm52, %v225, 0
    %v233 = vsel %vm52, %v226, 0
    %235 = vmatprep.subr.bf16.mxu0 0
    %236 = vmatpush1.bf16.xpose.msra.mxu0 0
    %237 = vmatprep.subr.bf16.mxu0 0
    %238 = vmatpush1.bf16.xpose.msra.mxu0 0
    %239 = vmatprep.subr.bf16.mxu0 0
    %240 = vmatpush1.bf16.xpose.msra.mxu0 0
    %241 = vmatprep.subr.bf16.mxu0 0
    %242 = vmatpush1.bf16.xpose.msra.mxu0 0
    %243 = vmatprep.subr.bf16.mxu0 0
    %244 = vmatpush1.bf16.xpose.msra.mxu0 0
    %245 = vmatprep.subr.bf16.mxu0 0
    %246 = vmatpush1.bf16.xpose.msra.mxu0 0
    %247 = vmatprep.subr.bf16.mxu0 0
    %248 = vmatpush1.bf16.xpose.msra.mxu0 0
    %249 = vmatprep.subr.bf16.mxu0 0
    %250 = vmatpush1.bf16.xpose.msra.mxu0 %v233
    %251 = vmatprep.subr.bf16.mxu0 0
    %252 = vmatpush2.bf16.xpose.msra.mxu0 0
    %253 = vmatprep.subr.bf16.mxu0 0
    %254 = vmatpush2.bf16.xpose.msra.mxu0 0
    %255 = vmatprep.subr.bf16.mxu0 0
    %256 = vmatpush2.bf16.xpose.msra.mxu0 0
    %257 = vmatprep.subr.bf16.mxu0 0
    %258 = vmatpush2.bf16.xpose.msra.mxu0 0
    %259 = vmatprep.subr.bf16.mxu0 0
    %260 = vmatpush2.bf16.xpose.msra.mxu0 0
    %261 = vmatprep.subr.bf16.mxu0 0
    %262 = vmatpush2.bf16.xpose.msra.mxu0 0
    %263 = vmatprep.subr.bf16.mxu0 0
    %264 = vmatpush2.bf16.xpose.msra.mxu0 0
    %265 = vmatprep.subr.bf16.mxu0 0
    %266 = vmatpush2.bf16.xpose.msra.mxu0 0
    %267 = vmatprep.mubr.bf16.mxu0 0
    %268 = vmatmul.mubr.bf16.gmra.mxu0 %v230
    %v269 = vpop.f32.mrf.mxu0
    %v270 = vadd.f32 %v228, %v269
    %v271 = vpop.f32.mrf.mxu0
    %v272 = vpop.f32.mrf.mxu0
    %v273 = vpop.f32.mrf.mxu0
    %274 = vdwg.mxu0
    %v275 = vsub.f32 0.0, %v270
    %v276 = vmul.f32 %v275, 1.442695
    %v277 = vpow.pop %v276
    %v278 = vadd.f32 %v277, 1.0
    %v279 = vrcp.pop %v278
    %vm280 = vcmask 57344
    %281 = vst.msk [vmem:[#allocation3] sm:$0x1] %vm280, %v279
    // Predicated region
    $region38: #{tpu_custom_call.1} parent=1 // pred_check
      _
    $region39: #{tpu_custom_call.1} parent=1 // pred_check_branch
      %283 = sbr.rel (0) target = $region41
    $region40: #{tpu_custom_call.1} parent=1 // pred_region
      %s285 = ssub.s32 16, 16
      %286 = vsyncadd [#allocation4], %s285
      %s288 = sshll.u32 [#allocation3], 4
      %s289 = int_to_ptr.vmem [resolvable:$true] %s288
      %291 = dma.vmem_to_hbm [thread:$0]  %s289, 16, %s9, [#allocation4]
    $region41: #{tpu_custom_call.1} parent=1 // pred_fallthru
      _
    // Predicated region
    $region42: #{tpu_custom_call.1} parent=1 // pred_check
      _
    $region43: #{tpu_custom_call.1} parent=1 // pred_check_branch
      %293 = sbr.rel (0) target = $region45
    $region44: #{tpu_custom_call.1} parent=1 // pred_region
      %294 = dma.done [#allocation4], 16
    $region45: #{tpu_custom_call.1} parent=1 // pred_fallthru
      _
    %295 = vsyncpa [#allocation4], 1

</llo_original>
